<compile_context>
chip_gen: v7x
topology: tpu7x:2x2x1
jax: 0.10.0
libtpu: 0.0.40
codegen_flags: <defaults>
</compile_context>

<pallas_src>
import functools
import math

import jax
import jax.numpy as jnp
import numpy as np
from jax import lax
from jax.experimental import pallas as pl
from jax.experimental.pallas import tpu as pltpu


def _choose_lane_tile(nl, l, max_lanes=2048):
    """Lane tile for the (rows, N*L) slabs.

    The tile must be a multiple of L (so batch boundaries coincide with tile edges) and
    either the whole slab or a multiple of 128 (unmasked lane-dense loads/stores).
    max_lanes keeps double-buffered in+out tiles well inside v7x's 32 MiB scoped VMEM
    even at large channel counts.
    """
    if nl <= max_lanes:
        return nl
    step = l * 128 // math.gcd(l, 128)  # lcm(L, 128)
    t = (max_lanes // step) * step
    while t >= step:
        if nl % t == 0:
            return t
        t -= step
    return nl  # fallback: single block


def _deconv_k4s2p1_kernel(x_ref, w_ref, b_ref, out_ref, stats_ref, *, L, add_bias):
    """One stacked MXU matmul per lane tile.

    x_ref:     (C_in, T)        channel-major input slab tile (lanes = batch-major positions)
    w_ref:     (2*C_out, 3*C_in) stacked tap weights; rows [0:C_out] even stream, rest odd
    b_ref:     (2*C_out, 1)     stacked bias (added only when add_bias, i.e. last=True)
    out_ref:   (2*C_out, T)     even/odd output streams, channel-major, lane-dense
    stats_ref: (2*C_out, 2)     per-tile [sum, sum-of-squares] for the fused BN statistics
    """
    x = x_ref[...]
    c_in, t = x.shape
    zero_col = jnp.zeros((c_in, 1), x.dtype)
    x_prev = jnp.concatenate([zero_col, x[:, :-1]], axis=1)  # x[m-1] tap
    x_next = jnp.concatenate([x[:, 1:], zero_col], axis=1)   # x[m+1] tap
    # Zero columns whose neighbour lies in a different batch.  Tile size is a multiple of L,
    # so local position mod L == global position mod L and tile edges are batch edges.
    pos = lax.broadcasted_iota(jnp.int32, (c_in, t), 1) % L
    x_prev = jnp.where(pos == 0, 0.0, x_prev)
    x_next = jnp.where(pos == L - 1, 0.0, x_next)

    rhs = jnp.concatenate([x_prev, x, x_next], axis=0)        # (3*C_in, T)
    out = jnp.dot(w_ref[...], rhs, preferred_element_type=jnp.float32)  # (2*C_out, T)
    if add_bias:
        out = out + b_ref[...]
    out_ref[...] = out.astype(out_ref.dtype)

    # Per-channel-stream partial sums for the fused BatchNorm statistics (lane reduce -> XLU).
    s1 = jnp.sum(out, axis=1, keepdims=True)
    s2 = jnp.sum(out * out, axis=1, keepdims=True)
    stats_ref[...] = jnp.concatenate([s1, s2], axis=1)


def _bn_relu_kernel(y_ref, stats_ref, g_ref, beta_ref, o_ref, *, count, eps):
    """Training-mode BatchNorm1d (biased variance, batch stats) + ReLU on the stacked slab.

    y_ref:     (2*C_out, T)     even/odd streams of the deconv output (bias not folded in)
    stats_ref: (G, 2*C_out, 2)  per-tile [sum, sumsq] accumulated by the deconv kernel
    g_ref, beta_ref: (C_out, 1)
    """
    y = y_ref[...]
    c_out = g_ref.shape[0]
    st = jnp.sum(stats_ref[...], axis=0)               # (2*C_out, 2) reduce over tiles
    s1 = st[:c_out, 0:1] + st[c_out:, 0:1]             # (C_out, 1): even + odd halves
    s2 = st[:c_out, 1:2] + st[c_out:, 1:2]
    inv_n = 1.0 / count
    mean = s1 * inv_n
    var = jnp.maximum(s2 * inv_n - mean * mean, 0.0)    # biased variance (torch BN fwd)
    scale = g_ref[...] * lax.rsqrt(var + eps)           # (C_out, 1)
    shift = beta_ref[...] - mean * scale
    scale2 = jnp.concatenate([scale, scale], axis=0)    # (2*C_out, 1) for both streams
    shift2 = jnp.concatenate([shift, shift], axis=0)
    o_ref[...] = jnp.maximum(y * scale2 + shift2, 0.0).astype(o_ref.dtype)


def deconv1d_forward(x, params, last=False, eps=1e-5):
    """Forward of Deconv1D: ConvTranspose1d(k=4, s=2, p=1) (+ BatchNorm1d + ReLU unless last).

    x: (N, C_in, L); params: w (C_in, C_out, 4) [torch layout], b (C_out,), gamma/beta (C_out,).
    Returns (N, C_out, 2*L) float32.
    """
    N, C_in, L = x.shape
    w, b = params["w"], params["b"]
    C_out, K = w.shape[1], w.shape[2]
    assert K == 4, "kernel specialised to kernel_size=4, stride=2, padding=1"
    NL = N * L
    T = _choose_lane_tile(NL, L)
    G = NL // T

    # Channel-major input slab (C_in, N*L), lanes ordered batch-major (one small transpose).
    xc = jnp.transpose(x, (1, 0, 2)).reshape(C_in, NL)

    # Stacked tap weights: even[m] = W1^T x[m] + W3^T x[m-1];  odd[m] = W2^T x[m] + W0^T x[m+1]
    wt = jnp.transpose(w, (2, 1, 0))                    # (K, C_out, C_in); wt[k] = w[:, :, k].T
    zeros = jnp.zeros((C_out, C_in), w.dtype)
    w_stack = jnp.concatenate(
        [jnp.concatenate([wt[3], wt[1], zeros], axis=1),   # even rows: [prev | cur | next]
         jnp.concatenate([zeros, wt[2], wt[0]], axis=1)],  # odd rows
        axis=0)                                            # (2*C_out, 3*C_in)
    b_stack = jnp.concatenate([b, b]).reshape(2 * C_out, 1)

    # Bias is only added on the last=True path (BatchNorm's mean subtraction cancels it).
    slab, stats = pl.pallas_call(
        functools.partial(_deconv_k4s2p1_kernel, L=L, add_bias=last),
        grid=(G,),
        in_specs=[
            pl.BlockSpec((C_in, T), lambda i: (0, i)),
            pl.BlockSpec((2 * C_out, 3 * C_in), lambda i: (0, 0)),
            pl.BlockSpec((2 * C_out, 1), lambda i: (0, 0)),
        ],
        out_specs=[
            pl.BlockSpec((2 * C_out, T), lambda i: (0, i)),
            pl.BlockSpec((None, 2 * C_out, 2), lambda i: (i, 0, 0)),
        ],
        out_shape=[
            jax.ShapeDtypeStruct((2 * C_out, NL), jnp.float32),
            jax.ShapeDtypeStruct((G, 2 * C_out, 2), jnp.float32),
        ],
        compiler_params=pltpu.CompilerParams(dimension_semantics=("parallel",)),
    )(xc, w_stack, b_stack)

    if not last:
        gamma2 = params["gamma"].reshape(C_out, 1)
        beta2 = params["beta"].reshape(C_out, 1)
        slab = pl.pallas_call(
            functools.partial(_bn_relu_kernel, count=float(N * 2 * L), eps=eps),
            grid=(G,),
            in_specs=[
                pl.BlockSpec((2 * C_out, T), lambda i: (0, i)),
                pl.BlockSpec((G, 2 * C_out, 2), lambda i: (0, 0, 0)),
                pl.BlockSpec((C_out, 1), lambda i: (0, 0)),
                pl.BlockSpec((C_out, 1), lambda i: (0, 0)),
            ],
            out_specs=pl.BlockSpec((2 * C_out, T), lambda i: (0, i)),
            out_shape=jax.ShapeDtypeStruct((2 * C_out, NL), jnp.float32),
            compiler_params=pltpu.CompilerParams(dimension_semantics=("parallel",)),
        )(slab, stats, gamma2, beta2)

    # Single remaining layout op: stacked even/odd channel-major streams -> interleaved
    # PyTorch (N, C_out, 2L).  The reshapes are free; only the transpose moves data.
    # TODO(synk): interleaving inside the kernel needs a lane-interleave relayout
    # ((C, T, 2) -> (C, 2T) reshape) that Mosaic may not lower cleanly; left to XLA.
    y = slab.reshape(2, C_out, N, L)
    y = jnp.transpose(y, (2, 1, 3, 0)).reshape(N, C_out, 2 * L)
    return y


def _numpy_reference(x, w, b, gamma, beta, last, eps=1e-5):
    x, w, b = np.asarray(x, np.float64), np.asarray(w, np.float64), np.asarray(b, np.float64)
    N, C_in, L = x.shape
    C_out, K = w.shape[1], w.shape[2]
    stride, padding = 2, 1
    full = np.zeros((N, C_out, (L - 1) * stride + K), np.float64)
    for i in range(L):
        for k in range(K):
            full[:, :, i * stride + k] += x[:, :, i] @ w[:, :, k]
    y = full[:, :, padding: padding + 2 * L] + b[None, :, None]
    if last:
        return y
    mean = y.mean(axis=(0, 2), keepdims=True)
    var = ((y - mean) ** 2).mean(axis=(0, 2), keepdims=True)
    yn = (y - mean) / np.sqrt(var + eps)
    out = yn * np.asarray(gamma)[None, :, None] + np.asarray(beta)[None, :, None]
    return np.maximum(out, 0.0)


if __name__ == "__main__":
    # Module config: Deconv1D(n_channels=4, n_kernels=8), input (batch=2, channels=4, length=16)
    N, C_in, C_out, L, K = 2, 4, 8, 16, 4

    key = jax.random.PRNGKey(0)
    kw, kb, kx = jax.random.split(key, 3)

    # xavier_uniform_ on ConvTranspose1d weight (C_in, C_out, K):
    fan_in, fan_out = C_out * K, C_in * K
    bound_w = float(np.sqrt(6.0 / (fan_in + fan_out)))
    w = jax.random.uniform(kw, (C_in, C_out, K), jnp.float32, -bound_w, bound_w)
    bound_b = float(1.0 / np.sqrt(fan_in))
    b = jax.random.uniform(kb, (C_out,), jnp.float32, -bound_b, bound_b)
    gamma = jnp.ones((C_out,), jnp.float32)   # BatchNorm1d default affine params
    beta = jnp.zeros((C_out,), jnp.float32)

    x = jax.random.normal(kx, (N, C_in, L), jnp.float32)
    params = dict(w=w, b=b, gamma=gamma, beta=beta)

    # Tolerances reflect MXU default (bf16-class) matmul precision (Precision.HIGHEST
    # deliberately dropped per the perf review); reference is float64.
    atol = rtol = 2e-2

    # Default (not last): deconv + BatchNorm1d (training-mode batch stats) + ReLU.
    out = jax.block_until_ready(deconv1d_forward(x, params, last=False))
    ref = _numpy_reference(x, w, b, gamma, beta, last=False)
    np.testing.assert_allclose(np.asarray(out), ref, atol=atol, rtol=rtol)

    # last=True path: deconv only (bias added in-kernel).
    out_last = jax.block_until_ready(deconv1d_forward(x, params, last=True))
    ref_last = _numpy_reference(x, w, b, gamma, beta, last=True)
    np.testing.assert_allclose(np.asarray(out_last), ref_last, atol=atol, rtol=rtol)

    print("KERNEL_OK")
</pallas_src>

<mosaic_0001>
module attributes {stable_mosaic.version = 11 : i64} {
  func.func @_deconv_k4s2p1_kernel(%arg0: i32, %arg1: memref<4x32xf32, #tpu.memory_space<vmem>>, %arg2: memref<16x12xf32, #tpu.memory_space<vmem>>, %arg3: memref<16x1xf32, #tpu.memory_space<vmem>>, %arg4: memref<16x32xf32, #tpu.memory_space<vmem>>, %arg5: memref<1x16x2xf32, #tpu.memory_space<vmem>>) attributes {dimension_semantics = [#tpu.dimension_semantics<parallel>], iteration_bounds = array<i64: 1>, scalar_prefetch = 0 : i64, scratch_operands = 0 : i64, tpu.core_type = #tpu.core_type<tc>, window_params = [{transform_indices = @transform_0, window_bounds = array<i64: 4, 32>}, {pipeline_mode = #tpu.pipeline_mode<synchronous>, transform_indices = @transform_1, window_bounds = array<i64: 16, 12>}, {pipeline_mode = #tpu.pipeline_mode<synchronous>, transform_indices = @transform_2, window_bounds = array<i64: 16, 1>}, {transform_indices = @transform_3, window_bounds = array<i64: 16, 32>}, {transform_indices = @transform_4, window_bounds = array<i64: 1, 16, 2>}]} {
    %c0 = arith.constant 0 : index
    %c0_0 = arith.constant 0 : index
    %0 = vector.load %arg1[%c0, %c0_0] : memref<4x32xf32, #tpu.memory_space<vmem>>, vector<4x32xf32>
    %cst = arith.constant 0.000000e+00 : f32
    %1 = vector.broadcast %cst : f32 to vector<4x1xf32>
    %2 = vector.extract_strided_slice %0 {offsets = [0, 0], sizes = [4, 31], strides = [1, 1]} : vector<4x32xf32> to vector<4x31xf32>
    %3 = tpu.concatenate %1, %2 in 1 : vector<4x1xf32>, vector<4x31xf32> -> vector<4x32xf32>
    %4 = vector.extract_strided_slice %0 {offsets = [0, 1], sizes = [4, 31], strides = [1, 1]} : vector<4x32xf32> to vector<4x31xf32>
    %5 = tpu.concatenate %4, %1 in 1 : vector<4x31xf32>, vector<4x1xf32> -> vector<4x32xf32>
    %6 = tpu.iota {dimensions = array<i32: 1>} : vector<4x32xi32>
    %c16_i32 = arith.constant 16 : i32
    %c0_i32 = arith.constant 0 : i32
    %7 = arith.cmpi eq, %c16_i32, %c0_i32 : i32
    %c1_i32 = arith.constant 1 : i32
    %8 = arith.select %7, %c1_i32, %c16_i32 : i32
    %9 = vector.broadcast %8 : i32 to vector<4x32xi32>
    %10 = arith.remsi %6, %9 : vector<4x32xi32>
    %c0_i32_1 = arith.constant 0 : i32
    %11 = vector.broadcast %c0_i32_1 : i32 to vector<4x32xi32>
    %12 = arith.cmpi ne, %10, %11 : vector<4x32xi32>
    %c0_i32_2 = arith.constant 0 : i32
    %13 = vector.broadcast %c0_i32_2 : i32 to vector<4x32xi32>
    %14 = arith.cmpi slt, %10, %13 : vector<4x32xi32>
    %c0_i32_3 = arith.constant 0 : i32
    %15 = arith.cmpi slt, %8, %c0_i32_3 : i32
    %16 = vector.broadcast %15 : i1 to vector<4x32xi1>
    %17 = vector.broadcast %16 : vector<4x32xi1> to vector<4x32xi1>
    %18 = arith.xori %14, %17 : vector<4x32xi1>
    %19 = arith.andi %18, %12 : vector<4x32xi1>
    %20 = vector.broadcast %8 : i32 to vector<4x32xi32>
    %21 = arith.addi %10, %20 : vector<4x32xi32>
    %22 = arith.select %19, %21, %10 : vector<4x32xi1>, vector<4x32xi32>
    %c0_i32_4 = arith.constant 0 : i32
    %23 = vector.broadcast %c0_i32_4 : i32 to vector<4x32xi32>
    %24 = arith.cmpi eq, %22, %23 : vector<4x32xi32>
    %cst_5 = arith.constant 0.000000e+00 : f32
    %25 = vector.broadcast %cst_5 : f32 to vector<4x32xf32>
    %26 = arith.select %24, %25, %3 : vector<4x32xi1>, vector<4x32xf32>
    %c15_i32 = arith.constant 15 : i32
    %27 = vector.broadcast %c15_i32 : i32 to vector<4x32xi32>
    %28 = arith.cmpi eq, %22, %27 : vector<4x32xi32>
    %cst_6 = arith.constant 0.000000e+00 : f32
    %29 = vector.broadcast %cst_6 : f32 to vector<4x32xf32>
    %30 = arith.select %28, %29, %5 : vector<4x32xi1>, vector<4x32xf32>
    %31 = tpu.concatenate %26, %0, %30 in 0 : vector<4x32xf32>, vector<4x32xf32>, vector<4x32xf32> -> vector<12x32xf32>
    %c0_7 = arith.constant 0 : index
    %c0_8 = arith.constant 0 : index
    %32 = vector.load %arg2[%c0_7, %c0_8] : memref<16x12xf32, #tpu.memory_space<vmem>>, vector<16x12xf32>
    %cst_9 = arith.constant dense<0.000000e+00> : vector<16x32xf32>
    %33 = tpu.matmul %32, %31, %cst_9 {dimension_numbers = #tpu.dot_dimension_numbers<[1], [0], [0], [1], [0, 0, 1, 1], [], []>} : vector<16x12xf32>, vector<12x32xf32>, vector<16x32xf32> -> vector<16x32xf32>
    %c0_10 = arith.constant 0 : index
    %c0_11 = arith.constant 0 : index
    %34 = vector.load %arg4[%c0_10, %c0_11] : memref<16x32xf32, #tpu.memory_space<vmem>>, vector<16x32xf32>
    tpu.vector_store %arg4[%c0_10, %c0_11], %33 {strides = array<i32>} : memref<16x32xf32, #tpu.memory_space<vmem>>, vector<16x32xf32>,
    %cst_12 = arith.constant dense<0.000000e+00> : vector<16xf32>
    %35 = vector.multi_reduction <add>, %33, %cst_12 [1] : vector<16x32xf32> to vector<16xf32>
    %36 = vector.shape_cast %35 : vector<16xf32> to vector<16x1xf32>
    %37 = arith.mulf %33, %33 : vector<16x32xf32>
    %cst_13 = arith.constant dense<0.000000e+00> : vector<16xf32>
    %38 = vector.multi_reduction <add>, %37, %cst_13 [1] : vector<16x32xf32> to vector<16xf32>
    %39 = vector.shape_cast %38 : vector<16xf32> to vector<16x1xf32>
    %40 = tpu.concatenate %36, %39 in 1 : vector<16x1xf32>, vector<16x1xf32> -> vector<16x2xf32>
    %c0_14 = arith.constant 0 : index
    %c0_15 = arith.constant 0 : index
    %c0_16 = arith.constant 0 : index
    %41 = vector.load %arg5[%c0_14, %c0_15, %c0_16] : memref<1x16x2xf32, #tpu.memory_space<vmem>>, vector<1x16x2xf32>
    %42 = vector.shape_cast %41 : vector<1x16x2xf32> to vector<16x2xf32>
    %43 = vector.shape_cast %40 : vector<16x2xf32> to vector<1x16x2xf32>
    tpu.vector_store %arg5[%c0_14, %c0_15, %c0_16], %43 {strides = array<i32>} : memref<1x16x2xf32, #tpu.memory_space<vmem>>, vector<1x16x2xf32>,
    return
  }
  func.func @transform_0(%arg0: i32) -> (i32, i32) {
    %c0_i32 = arith.constant 0 : i32
    %c0_i32_0 = arith.constant 0 : i32
    return %c0_i32, %arg0 : i32, i32
  }
  func.func @transform_1(%arg0: i32) -> (i32, i32) {
    %c0_i32 = arith.constant 0 : i32
    %c0_i32_0 = arith.constant 0 : i32
    %c0_i32_1 = arith.constant 0 : i32
    return %c0_i32, %c0_i32_0 : i32, i32
  }
  func.func @transform_2(%arg0: i32) -> (i32, i32) {
    %c0_i32 = arith.constant 0 : i32
    %c0_i32_0 = arith.constant 0 : i32
    %c0_i32_1 = arith.constant 0 : i32
    return %c0_i32, %c0_i32_0 : i32, i32
  }
  func.func @transform_3(%arg0: i32) -> (i32, i32) {
    %c0_i32 = arith.constant 0 : i32
    %c0_i32_0 = arith.constant 0 : i32
    return %c0_i32, %arg0 : i32, i32
  }
  func.func @transform_4(%arg0: i32) -> (i32, i32, i32) {
    %c0_i32 = arith.constant 0 : i32
    %c0_i32_0 = arith.constant 0 : i32
    %c0_i32_1 = arith.constant 0 : i32
    return %arg0, %c0_i32, %c0_i32_0 : i32, i32, i32
  }
}

</mosaic_0001>

<llo_original>
// kernel: tpu_custom_call.1
$region0: #{tpu_custom_call.1}
  #allocation0 [shape = 'u32[]', space=smem, size = 0x4, offset = 0x4, fixed_abs, tag = 'smem constant byte address 0x4 - core index']
  #allocation1 [shape = 'u32[144,128]{1,0:T(1,128)}', space=vmem, size = 0x12000, scoped, tag = 'internal scratch']
  %s0 = inlined_call_operand.vmem [shape: f32[4,32], index: 0, kind: input, shape index: {}]
  %s1 = inlined_call_operand.vmem [shape: f32[16,12], index: 1, kind: input, shape index: {}]
  %s2 = inlined_call_operand.vmem [shape: f32[16,1], index: 2, kind: input, shape index: {}]
  %s3 = inlined_call_operand.hbm [shape: f32[16,32], index: 3, kind: output, shape index: {0}]
  %s4 = inlined_call_operand.vmem [shape: f32[1,16,2], index: 4, kind: output, shape index: {1}]
  %5 = xla_tuple %s3, %s4
  %s6 = sld [smem:[#allocation0]]
  $region30: #{tpu_custom_call.1} parent=0
    _
  %s8 = ssub.s32 1, %s6
  %s9 = scalar_select 0, %s8, %s6
  $region1: #{tpu_custom_call.1} parent=0
    #allocation2 [shape = 'u8[8192]{0}', space=vmem, size = 0x2000, scoped, tag = 'output window, operand 0, single buffered']
    #allocation3 [shape = 's32[1]{0}', space=sflag, size = 0x4, scoped, tag = 'scoped memory for tpu_custom_call.1']
    %10 = vsyncpa [#allocation3], 0
    // Predicated region
    $region2: #{tpu_custom_call.1} parent=1 // pred_check
      _
    $region3: #{tpu_custom_call.1} parent=1 // pred_check_branch
      %12 = sbr.rel (0) target = $region5
    $region4: #{tpu_custom_call.1} parent=1 // pred_region
      _
    $region5: #{tpu_custom_call.1} parent=1 // pred_fallthru
      _
    // Predicated region
    $region6: #{tpu_custom_call.1} parent=1 // pred_check
      _
    $region7: #{tpu_custom_call.1} parent=1 // pred_check_branch
      %14 = sbr.rel (0) target = $region9
    $region8: #{tpu_custom_call.1} parent=1 // pred_region
      _
    $region9: #{tpu_custom_call.1} parent=1 // pred_fallthru
      _
    // Predicated region
    $region10: #{tpu_custom_call.1} parent=1 // pred_check
      _
    $region11: #{tpu_custom_call.1} parent=1 // pred_check_branch
      %16 = sbr.rel (0) target = $region13
    $region12: #{tpu_custom_call.1} parent=1 // pred_region
      _
    $region13: #{tpu_custom_call.1} parent=1 // pred_fallthru
      _
    %v17 = vld [vmem:[%s0] sm:$0xf]
    %19 = vrot.lane.b32.xlu0 %v17, 1
    %v20 = vpop.permute.xlu0 %19
    %vm22 = vcmask 7168
    %v23 = vsel %vm22, 0.0, %v20
    %24 = vrot.lane.b32.xlu0 %v17, 127
    %v25 = vpop.permute.xlu0 %24
    %vm27 = vcmask 252928
    %v28 = vsel %vm27, %v25, 0.0
    %v29 = vlaneseq
    %v30 = vand.u32 %v29, 127
    %vm31 = vcmp.lt.s32.totalorder %v30, 0
    %v32 = vsub.s32 0, %v30
    %v33 = vsel %vm31, %v32, %v30
    %v34 = vshrl.u32 %v33, 4
    %v35 = vand.u32 %v33, 15
    %v36 = vsub.s32 0, %v35
    %v37 = vsel %vm31, %v36, %v35
    %vm38 = vcmp.ne.s32.totalorder %v37, 0
    %vm39 = vcmp.lt.s32.totalorder %v37, 0
    %vm40 = vmand %vm39, %vm38
    %v41 = vadd.s32 %v37, 16
    %v42 = vsel %vm40, %v41, %v37
    %vm43 = vcmp.eq.s32.totalorder %v42, 0
    %v44 = vsel %vm43, 0.0, %v23
    %vm45 = vcmp.eq.s32.totalorder %v42, 15
    %v46 = vsel %vm45, 0.0, %v28
    %v47 = vrot.slane %v17, 4
    %vm49 = vcmask 1043456
    %v50 = vsel %vm49, %v44, %v47
    %v51 = vld [vmem:[%s1] sm:$0xff]
    %v52 = vld [vmem:[%s1 + $0x8] sm:$0xff]
    %vm53 = vcmask 97280
    %v55 = vsel %vm53, %v51, 0
    %v58 = vsel %vm53, %v52, 0
    %v61 = vsel %vm49, %v46, 0
    %63 = vmatprep.subr.mxu0 0.0
    %64 = vmatpush1.msra.mxu0 %v50
    %65 = vmatprep.subr.mxu0 0.0
    %66 = vmatpush1.msra.mxu0 %v61
    %67 = vmatprep.subr.mxu0 0.0
    %68 = vmatpush1.msra.mxu0 0.0
    %69 = vmatprep.subr.mxu0 0.0
    %70 = vmatpush1.msra.mxu0 0.0
    %71 = vmatprep.subr.mxu0 0.0
    %72 = vmatpush1.msra.mxu0 0.0
    %73 = vmatprep.subr.mxu0 0.0
    %74 = vmatpush1.msra.mxu0 0.0
    %75 = vmatprep.subr.mxu0 0.0
    %76 = vmatpush1.msra.mxu0 0.0
    %77 = vmatprep.subr.mxu0 0.0
    %78 = vmatpush1.msra.mxu0 0.0
    %79 = vmatprep.subr.mxu0 0.0
    %80 = vmatpush1.msra.mxu0 0.0
    %81 = vmatprep.subr.mxu0 0.0
    %82 = vmatpush1.msra.mxu0 0.0
    %83 = vmatprep.subr.mxu0 0.0
    %84 = vmatpush1.msra.mxu0 0.0
    %85 = vmatprep.subr.mxu0 0.0
    %86 = vmatpush1.msra.mxu0 0.0
    %87 = vmatprep.subr.mxu0 0.0
    %88 = vmatpush1.msra.mxu0 0.0
    %89 = vmatprep.subr.mxu0 0.0
    %90 = vmatpush1.msra.mxu0 0.0
    %91 = vmatprep.subr.mxu0 0.0
    %92 = vmatpush1.msra.mxu0 0.0
    %93 = vmatprep.subr.mxu0 0.0
    %94 = vmatpush1.msra.mxu0 0.0
    %95 = vmatprep.subr.mxu0 0.0
    %96 = vmatpush1.msra.mxu0 0.0
    %97 = vmatprep.subr.mxu0 0.0
    %98 = vmatpush1.msra.mxu0 0.0
    %99 = vmatprep.subr.mxu0 0.0
    %100 = vmatpush1.msra.mxu0 0.0
    %101 = vmatprep.subr.mxu0 0.0
    %102 = vmatpush1.msra.mxu0 0.0
    %103 = vmatprep.subr.mxu0 0.0
    %104 = vmatpush1.msra.mxu0 0.0
    %105 = vmatprep.subr.mxu0 0.0
    %106 = vmatpush1.msra.mxu0 0.0
    %107 = vmatprep.subr.mxu0 0.0
    %108 = vmatpush1.msra.mxu0 0.0
    %109 = vmatprep.subr.mxu0 0.0
    %110 = vmatpush1.msra.mxu0 0.0
    %111 = vmatprep.subr.mxu0 0.0
    %112 = vmatpush1.msra.mxu0 0.0
    %113 = vmatprep.subr.mxu0 0.0
    %114 = vmatpush1.msra.mxu0 0.0
    %115 = vmatprep.subr.mxu0 0.0
    %116 = vmatpush1.msra.mxu0 0.0
    %117 = vmatprep.subr.mxu0 0.0
    %118 = vmatpush1.msra.mxu0 0.0
    %119 = vmatprep.subr.mxu0 0.0
    %120 = vmatpush1.msra.mxu0 0.0
    %121 = vmatprep.subr.mxu0 0.0
    %122 = vmatpush1.msra.mxu0 0.0
    %123 = vmatprep.subr.mxu0 0.0
    %124 = vmatpush1.msra.mxu0 0.0
    %125 = vmatprep.subr.mxu0 0.0
    %126 = vmatpush1.msra.mxu0 0.0
    %127 = vmatprep.mubr.f32.mxu0 0.0
    %128 = vmatmul.mubr.f32.gmra.mrb[0].mxu0 %v55
    %v129 = vpop.f32.mrb[0].mxu0
    %v130 = vadd.f32 0.0, %v129
    %v131 = vpop.f32.mrb[0].mxu0
    %132 = vmatprep.mubr.f32.mxu0 0.0
    %133 = vmatmul.mubr.f32.gmra.mrb[0].mxu0 %v58
    %v134 = vpop.f32.mrb[0].mxu0
    %v135 = vadd.f32 0.0, %v134
    %v136 = vpop.f32.mrb[0].mxu0
    %137 = vdwg.mxu0
    %vm138 = vcmask 261120
    %139 = vst.msk [vmem:[#allocation2] sm:$0xff] %vm138, %v130
    %140 = vst.msk [vmem:[#allocation2 + $0x8] sm:$0xff] %vm138, %v135
    %v141 = vsel %vm138, %v130, 0.0
    %142 = vadd.xlane.f32.xlu0 %v141
    %v143 = vpop.xlane.xlu0 %142
    %v144 = vsel %vm138, %v135, 0.0
    %145 = vadd.xlane.f32.xlu0 %v144
    %v146 = vpop.xlane.xlu0 %145
    %v147 = vmul.f32 %v130, %v130
    %v148 = vmul.f32 %v135, %v135
    %v149 = vsel %vm138, %v147, 0.0
    %150 = vadd.xlane.f32.xlu0 %v149
    %v151 = vpop.xlane.xlu0 %150
    %v152 = vsel %vm138, %v148, 0.0
    %153 = vadd.xlane.f32.xlu0 %v152
    %v154 = vpop.xlane.xlu0 %153
    %v155 = vsel %vm22, %v143, %v151
    %v156 = vsel %vm22, %v146, %v154
    %vm157 = vcmask 15360
    %158 = vst.msk [vmem:[%s4] sm:$0xff] %vm157, %v155
    %159 = vst.msk [vmem:[%s4 + $0x8] sm:$0xff] %vm157, %v156
    // Predicated region
    $region14: #{tpu_custom_call.1} parent=1 // pred_check
      _
    $region15: #{tpu_custom_call.1} parent=1 // pred_check_branch
      %161 = sbr.rel (0) target = $region17
    $region16: #{tpu_custom_call.1} parent=1 // pred_region
      %s163 = ssub.s32 256, 256
      %164 = vsyncadd [#allocation3], %s163
      %s165 = sshll.u32 [#allocation2], 4
      %s166 = int_to_ptr.vmem [resolvable:$true] %s165
      %171 = dma.vmem_to_hbm [thread:$0]  %s166, 256, %s3, [#allocation3], 128, 128, 8
    $region17: #{tpu_custom_call.1} parent=1 // pred_fallthru
      _
    // Predicated region
    $region18: #{tpu_custom_call.1} parent=1 // pred_check
      _
    $region19: #{tpu_custom_call.1} parent=1 // pred_check_branch
      %173 = sbr.rel (0) target = $region21
    $region20: #{tpu_custom_call.1} parent=1 // pred_region
      _
    $region21: #{tpu_custom_call.1} parent=1 // pred_fallthru
      _
    // Predicated region
    $region22: #{tpu_custom_call.1} parent=1 // pred_check
      _
    $region23: #{tpu_custom_call.1} parent=1 // pred_check_branch
      %175 = sbr.rel (0) target = $region25
    $region24: #{tpu_custom_call.1} parent=1 // pred_region
      %176 = dma.done [#allocation3], 256
    $region25: #{tpu_custom_call.1} parent=1 // pred_fallthru
      _
    // Predicated region
    $region26: #{tpu_custom_call.1} parent=1 // pred_check
      _
    $region27: #{tpu_custom_call.1} parent=1 // pred_check_branch
      %178 = sbr.rel (0) target = $region29
    $region28: #{tpu_custom_call.1} parent=1 // pred_region
      _
    $region29: #{tpu_custom_call.1} parent=1 // pred_fallthru
      _
    %179 = vsyncpa [#allocation3], 1

</llo_original>
